<compile_context>
chip_gen: v6e
topology: v6e:2x2x1
jax: 0.10.0
libtpu: 0.0.40
codegen_flags: <defaults>
</compile_context>

<pallas_src>
import jax
import jax.numpy as jnp
from jax.experimental import pallas as pl
from jax.experimental.pallas import tpu as pltpu


def _round_up(x, m):
    return ((x + m - 1) // m) * m


def _fused_kernel(xs_ref, xb_ref, wt_ref, wb_ref, b_ref, o_ref):
    # Two small MXU matmuls accumulate into one 128-lane-dense output tile.
    acc = jnp.dot(xs_ref[...], wt_ref[...], preferred_element_type=jnp.float32)
    acc = acc + jnp.dot(xb_ref[...], wb_ref[...], preferred_element_type=jnp.float32)
    o_ref[...] = jnp.maximum(acc + b_ref[...], 0.0).astype(o_ref.dtype)


def fuse_params(params):
    """Split the block-diagonal fused weight into top/bottom halves, lane-padded to 128.

    Returns (w_top, w_bot, bias, d_out). Columns >= d_out are all-zero padding,
    so the fused matmul is bit-identical to the two separate linears + cat.
    """
    w1, b1, w2, b2 = params
    k1, d1 = w1.shape
    k2, d2 = w2.shape
    d_out = d1 + d2
    d_pad = _round_up(d_out, 128)

    w_top = jnp.zeros((k1, d_pad), jnp.float32).at[:, :d1].set(w1)
    w_bot = jnp.zeros((k2, d_pad), jnp.float32).at[:, d1:d_out].set(w2)
    bias = jnp.zeros((1, d_pad), jnp.float32)
    bias = bias.at[:, :d1].set(b1.reshape(1, d1))
    bias = bias.at[:, d1:d_out].set(b2.reshape(1, d2))
    return w_top, w_bot, bias, d_out


def _batch_tile(batch):
    # Tiny batches: one block that exactly matches the array dims (always legal).
    if batch <= 8:
        return batch
    tb = min(2048, _round_up(batch, 8))
    # Keep >= 2 grid steps so both v7x TensorCores get work; no-op on v5e/v6e.
    tb = min(tb, _round_up(pl.cdiv(batch, 2), 8))
    return tb


@jax.jit
def _combined_call(x_seq, x_base, w_top, w_bot, bias):
    B = x_seq.shape[0]
    xs_flat = x_seq.reshape(B, -1)        # contiguous reshape: no HBM copy, same order as torch .flatten(1)
    k1 = xs_flat.shape[1]
    k2 = x_base.shape[1]
    d_pad = w_top.shape[1]
    tb = _batch_tile(B)

    return pl.pallas_call(
        _fused_kernel,
        out_shape=jax.ShapeDtypeStruct((B, d_pad), jnp.float32),
        grid=(pl.cdiv(B, tb),),
        in_specs=[
            pl.BlockSpec((tb, k1), lambda i: (i, 0)),      # seq activations, batch-tiled
            pl.BlockSpec((tb, k2), lambda i: (i, 0)),      # base activations, batch-tiled
            pl.BlockSpec((k1, d_pad), lambda i: (0, 0)),   # W top half: VMEM-resident
            pl.BlockSpec((k2, d_pad), lambda i: (0, 0)),   # W bottom half: VMEM-resident
            pl.BlockSpec((1, d_pad), lambda i: (0, 0)),    # bias: VMEM-resident
        ],
        out_specs=pl.BlockSpec((tb, d_pad), lambda i: (i, 0)),
        compiler_params=pltpu.CompilerParams(
            dimension_semantics=("parallel",),
        ),
    )(xs_flat, x_base, w_top, w_bot, bias)


def combined_model_forward(x_seq, x_base, fused_params):
    """x_seq: (B, seq, feature_length) f32; x_base: (B, base_len) f32.

    Returns the 128-lane-padded slab (B, d_pad); columns >= d_out are exactly
    zero. Slice [:, :d_out] if the consumer needs the exact torch.cat width
    (kept out of the hot path on purpose — it would add an extra HBM copy).
    """
    w_top, w_bot, bias, _ = fused_params
    return _combined_call(x_seq, x_base, w_top, w_bot, bias)


def init_params(key, seq, feature_length, base_len, d_seq=64, d_base=32):
    k1, k2, k3, k4 = jax.random.split(key, 4)
    in1 = seq * feature_length
    w1 = jax.random.normal(k1, (in1, d_seq), jnp.float32) * (1.0 / jnp.sqrt(in1))
    b1 = jax.random.normal(k2, (1, d_seq), jnp.float32) * 0.01
    w2 = jax.random.normal(k3, (base_len, d_base), jnp.float32) * (1.0 / jnp.sqrt(base_len))
    b2 = jax.random.normal(k4, (1, d_base), jnp.float32) * 0.01
    return w1, b1, w2, b2


def reference_forward(x_seq, x_base, params):
    """Pure-JAX reference matching the PyTorch forward."""
    w1, b1, w2, b2 = params
    xs = x_seq.reshape(x_seq.shape[0], -1)
    f1 = jnp.maximum(xs @ w1 + b1, 0.0)
    f2 = jnp.maximum(x_base @ w2 + b2, 0.0)
    return jnp.concatenate([f1, f2], axis=1)


if __name__ == "__main__":
    batch, seq, feature_length, base_len = 2, 8, 4, 16
    d_seq, d_base = 64, 32

    key = jax.random.PRNGKey(0)
    k_obs, k_base, k_params = jax.random.split(key, 3)

    x_seq = jax.random.normal(k_obs, (batch, seq, feature_length), jnp.float32)
    x_base = jax.random.normal(k_base, (batch, base_len), jnp.float32)
    params = init_params(k_params, seq, feature_length, base_len, d_seq, d_base)
    fused = fuse_params(params)
    d_out = fused[3]

    out = combined_model_forward(x_seq, x_base, fused)
    out = jax.block_until_ready(out)

    ref = reference_forward(x_seq, x_base, params)
    assert out.shape == (batch, _round_up(d_out, 128)), out.shape
    assert jnp.allclose(out[:, :d_out], ref, atol=1e-5, rtol=1e-5), "mismatch vs reference"
    assert bool(jnp.all(out[:, d_out:] == 0.0)), "lane padding not zero"

    print("KERNEL_OK")
</pallas_src>

<mosaic_0001>
module attributes {stable_mosaic.version = 11 : i64} {
  func.func @_fused_kernel(%arg0: i32, %arg1: memref<2x32xf32, #tpu.memory_space<vmem>>, %arg2: memref<2x16xf32, #tpu.memory_space<vmem>>, %arg3: memref<32x128xf32, #tpu.memory_space<vmem>>, %arg4: memref<16x128xf32, #tpu.memory_space<vmem>>, %arg5: memref<1x128xf32, #tpu.memory_space<vmem>>, %arg6: memref<2x128xf32, #tpu.memory_space<vmem>>) attributes {dimension_semantics = [#tpu.dimension_semantics<parallel>], iteration_bounds = array<i64: 1>, scalar_prefetch = 0 : i64, scratch_operands = 0 : i64, tpu.core_type = #tpu.core_type<tc>, window_params = [{transform_indices = @transform_0, window_bounds = array<i64: 2, 32>}, {transform_indices = @transform_1, window_bounds = array<i64: 2, 16>}, {pipeline_mode = #tpu.pipeline_mode<synchronous>, transform_indices = @transform_2, window_bounds = array<i64: 32, 128>}, {pipeline_mode = #tpu.pipeline_mode<synchronous>, transform_indices = @transform_3, window_bounds = array<i64: 16, 128>}, {pipeline_mode = #tpu.pipeline_mode<synchronous>, transform_indices = @transform_4, window_bounds = array<i64: 1, 128>}, {transform_indices = @transform_5, window_bounds = array<i64: 2, 128>}]} {
    %c0 = arith.constant 0 : index
    %c0_0 = arith.constant 0 : index
    %0 = vector.load %arg1[%c0, %c0_0] : memref<2x32xf32, #tpu.memory_space<vmem>>, vector<2x32xf32>
    %c0_1 = arith.constant 0 : index
    %c0_2 = arith.constant 0 : index
    %1 = vector.load %arg3[%c0_1, %c0_2] : memref<32x128xf32, #tpu.memory_space<vmem>>, vector<32x128xf32>
    %cst = arith.constant dense<0.000000e+00> : vector<2x128xf32>
    %2 = tpu.matmul %0, %1, %cst {dimension_numbers = #tpu.dot_dimension_numbers<[1], [0], [0], [1], [0, 0, 1, 1], [], []>} : vector<2x32xf32>, vector<32x128xf32>, vector<2x128xf32> -> vector<2x128xf32>
    %c0_3 = arith.constant 0 : index
    %c0_4 = arith.constant 0 : index
    %3 = vector.load %arg2[%c0_3, %c0_4] : memref<2x16xf32, #tpu.memory_space<vmem>>, vector<2x16xf32>
    %c0_5 = arith.constant 0 : index
    %c0_6 = arith.constant 0 : index
    %4 = vector.load %arg4[%c0_5, %c0_6] : memref<16x128xf32, #tpu.memory_space<vmem>>, vector<16x128xf32>
    %cst_7 = arith.constant dense<0.000000e+00> : vector<2x128xf32>
    %5 = tpu.matmul %3, %4, %cst_7 {dimension_numbers = #tpu.dot_dimension_numbers<[1], [0], [0], [1], [0, 0, 1, 1], [], []>} : vector<2x16xf32>, vector<16x128xf32>, vector<2x128xf32> -> vector<2x128xf32>
    %6 = arith.addf %2, %5 : vector<2x128xf32>
    %c0_8 = arith.constant 0 : index
    %c0_9 = arith.constant 0 : index
    %7 = vector.load %arg5[%c0_8, %c0_9] : memref<1x128xf32, #tpu.memory_space<vmem>>, vector<1x128xf32>
    %8 = vector.broadcast %7 : vector<1x128xf32> to vector<2x128xf32>
    %9 = arith.addf %6, %8 : vector<2x128xf32>
    %cst_10 = arith.constant 0.000000e+00 : f32
    %10 = vector.broadcast %cst_10 : f32 to vector<2x128xf32>
    %11 = arith.maximumf %9, %10 : vector<2x128xf32>
    %c0_11 = arith.constant 0 : index
    %c0_12 = arith.constant 0 : index
    %12 = vector.load %arg6[%c0_11, %c0_12] : memref<2x128xf32, #tpu.memory_space<vmem>>, vector<2x128xf32>
    tpu.vector_store %arg6[%c0_11, %c0_12], %11 {strides = array<i32>} : memref<2x128xf32, #tpu.memory_space<vmem>>, vector<2x128xf32>,
    return
  }
  func.func @transform_0(%arg0: i32) -> (i32, i32) {
    %c0_i32 = arith.constant 0 : i32
    %c0_i32_0 = arith.constant 0 : i32
    return %arg0, %c0_i32 : i32, i32
  }
  func.func @transform_1(%arg0: i32) -> (i32, i32) {
    %c0_i32 = arith.constant 0 : i32
    %c0_i32_0 = arith.constant 0 : i32
    return %arg0, %c0_i32 : i32, i32
  }
  func.func @transform_2(%arg0: i32) -> (i32, i32) {
    %c0_i32 = arith.constant 0 : i32
    %c0_i32_0 = arith.constant 0 : i32
    %c0_i32_1 = arith.constant 0 : i32
    return %c0_i32, %c0_i32_0 : i32, i32
  }
  func.func @transform_3(%arg0: i32) -> (i32, i32) {
    %c0_i32 = arith.constant 0 : i32
    %c0_i32_0 = arith.constant 0 : i32
    %c0_i32_1 = arith.constant 0 : i32
    return %c0_i32, %c0_i32_0 : i32, i32
  }
  func.func @transform_4(%arg0: i32) -> (i32, i32) {
    %c0_i32 = arith.constant 0 : i32
    %c0_i32_0 = arith.constant 0 : i32
    %c0_i32_1 = arith.constant 0 : i32
    return %c0_i32, %c0_i32_0 : i32, i32
  }
  func.func @transform_5(%arg0: i32) -> (i32, i32) {
    %c0_i32 = arith.constant 0 : i32
    %c0_i32_0 = arith.constant 0 : i32
    return %arg0, %c0_i32 : i32, i32
  }
}

</mosaic_0001>

<llo_original>
// kernel: _combined_call.1
$region0: #{_combined_call.1}
  #allocation0 [shape = 'u32[]', space=smem, size = 0x4, offset = 0x4, fixed_abs, tag = 'smem constant byte address 0x4 - core index']
  #allocation1 [shape = 'u32[144,128]{1,0:T(1,128)}', space=vmem, size = 0x12000, scoped, tag = 'internal scratch']
  %s0 = inlined_call_operand.vmem [shape: f32[2,32], index: 0, kind: input, shape index: {}]
  %s1 = inlined_call_operand.vmem [shape: f32[2,16], index: 1, kind: input, shape index: {}]
  %s2 = inlined_call_operand.vmem [shape: f32[32,128], index: 2, kind: input, shape index: {}]
  %s3 = inlined_call_operand.hbm [shape: f32[16,128], index: 3, kind: input, shape index: {}]
  %s4 = inlined_call_operand.vmem [shape: f32[1,128], index: 4, kind: input, shape index: {}]
  %s5 = inlined_call_operand.hbm [shape: f32[2,128], index: 5, kind: output, shape index: {}]
  %s6 = sld [smem:[#allocation0]]
  $region34: #{_combined_call.1} parent=0
    _
  %s8 = ssub.s32 1, %s6
  %s9 = scalar_select 0, %s8, %s6
  $region1: #{_combined_call.1} parent=0
    #allocation2 [shape = 'u8[8192]{0}', space=vmem, size = 0x2000, scoped, tag = 'input window, operand 3, single buffered']
    #allocation3 [shape = 's32[1]{0}', space=sflag, size = 0x4, scoped, tag = 'scoped memory for _combined_call.1']
    #allocation4 [shape = 's32[1]{0}', space=sflag, size = 0x4, scoped, tag = 'scoped memory for _combined_call.1']
    #allocation5 [shape = 'u8[1024]{0}', space=vmem, size = 0x400, scoped, tag = 'output window, operand 0, single buffered']
    %10 = vsyncpa [#allocation3], 0
    %11 = vsyncpa [#allocation4], 0
    // Predicated region
    $region2: #{_combined_call.1} parent=1 // pred_check
      _
    $region3: #{_combined_call.1} parent=1 // pred_check_branch
      %13 = sbr.rel (0) target = $region5
    $region4: #{_combined_call.1} parent=1 // pred_region
      _
    $region5: #{_combined_call.1} parent=1 // pred_fallthru
      _
    // Predicated region
    $region6: #{_combined_call.1} parent=1 // pred_check
      _
    $region7: #{_combined_call.1} parent=1 // pred_check_branch
      %15 = sbr.rel (0) target = $region9
    $region8: #{_combined_call.1} parent=1 // pred_region
      _
    $region9: #{_combined_call.1} parent=1 // pred_fallthru
      _
    // Predicated region
    $region10: #{_combined_call.1} parent=1 // pred_check
      _
    $region11: #{_combined_call.1} parent=1 // pred_check_branch
      %17 = sbr.rel (0) target = $region13
    $region12: #{_combined_call.1} parent=1 // pred_region
      _
    $region13: #{_combined_call.1} parent=1 // pred_fallthru
      _
    // Predicated region
    $region14: #{_combined_call.1} parent=1 // pred_check
      _
    $region15: #{_combined_call.1} parent=1 // pred_check_branch
      %19 = sbr.rel (0) target = $region17
    $region16: #{_combined_call.1} parent=1 // pred_region
      %s21 = ssub.s32 256, 256
      %22 = vsyncadd [#allocation3], %s21
      %s23 = sshll.u32 [#allocation2], 4
      %s24 = int_to_ptr.vmem [resolvable:$true] %s23
      %29 = dma.hbm_to_vmem [thread:$0]  %s3, 256, %s24, [#allocation3], 128, 128, 8
    $region17: #{_combined_call.1} parent=1 // pred_fallthru
      _
    // Predicated region
    $region18: #{_combined_call.1} parent=1 // pred_check
      _
    $region19: #{_combined_call.1} parent=1 // pred_check_branch
      %31 = sbr.rel (0) target = $region21
    $region20: #{_combined_call.1} parent=1 // pred_region
      _
    $region21: #{_combined_call.1} parent=1 // pred_fallthru
      _
    // Predicated region
    $region22: #{_combined_call.1} parent=1 // pred_check
      _
    $region23: #{_combined_call.1} parent=1 // pred_check_branch
      %33 = sbr.rel (0) target = $region25
    $region24: #{_combined_call.1} parent=1 // pred_region
      %34 = dma.done [#allocation3], 256
    $region25: #{_combined_call.1} parent=1 // pred_fallthru
      _
    %v35 = vld [vmem:[%s0] sm:$0x3]
    %v36 = vld [vmem:[%s2] sm:$0xff]
    %v37 = vld [vmem:[%s2 + $0x8] sm:$0xff]
    %v38 = vld [vmem:[%s2 + $0x10] sm:$0xff]
    %v39 = vld [vmem:[%s2 + $0x18] sm:$0xff]
    %v40 = vld [vmem:[%s1] sm:$0x3]
    %v41 = vld [vmem:[#allocation2] sm:$0xff]
    %v42 = vld [vmem:[#allocation2 + $0x8] sm:$0xff]
    %vm43 = vcmask 130048
    %v45 = vsel %vm43, %v40, 0
    %47 = vmatprep.subr.mxu0 0.0
    %48 = vmatpush1.msra.mxu0 0.0
    %49 = vmatprep.subr.mxu0 0.0
    %50 = vmatpush1.msra.mxu0 0.0
    %51 = vmatprep.subr.mxu0 0.0
    %52 = vmatpush1.msra.mxu0 0.0
    %53 = vmatprep.subr.mxu0 0.0
    %54 = vmatpush1.msra.mxu0 0.0
    %55 = vmatprep.subr.mxu0 0.0
    %56 = vmatpush1.msra.mxu0 0.0
    %57 = vmatprep.subr.mxu0 0.0
    %58 = vmatpush1.msra.mxu0 0.0
    %59 = vmatprep.subr.mxu0 0.0
    %60 = vmatpush1.msra.mxu0 0.0
    %61 = vmatprep.subr.mxu0 0.0
    %62 = vmatpush1.msra.mxu0 0.0
    %63 = vmatprep.subr.mxu0 0.0
    %64 = vmatpush1.msra.mxu0 0.0
    %65 = vmatprep.subr.mxu0 0.0
    %66 = vmatpush1.msra.mxu0 0.0
    %67 = vmatprep.subr.mxu0 0.0
    %68 = vmatpush1.msra.mxu0 0.0
    %69 = vmatprep.subr.mxu0 0.0
    %70 = vmatpush1.msra.mxu0 0.0
    %71 = vmatprep.subr.mxu0 0.0
    %72 = vmatpush1.msra.mxu0 0.0
    %73 = vmatprep.subr.mxu0 0.0
    %74 = vmatpush1.msra.mxu0 0.0
    %75 = vmatprep.subr.mxu0 0.0
    %76 = vmatpush1.msra.mxu0 %v42
    %77 = vmatprep.subr.mxu0 0.0
    %78 = vmatpush1.msra.mxu0 %v41
    %79 = vmatprep.subr.mxu0 0.0
    %80 = vmatpush2.msra.mxu0 0.0
    %81 = vmatprep.subr.mxu0 0.0
    %82 = vmatpush2.msra.mxu0 0.0
    %83 = vmatprep.subr.mxu0 0.0
    %84 = vmatpush2.msra.mxu0 0.0
    %85 = vmatprep.subr.mxu0 0.0
    %86 = vmatpush2.msra.mxu0 0.0
    %87 = vmatprep.subr.mxu0 0.0
    %88 = vmatpush2.msra.mxu0 0.0
    %89 = vmatprep.subr.mxu0 0.0
    %90 = vmatpush2.msra.mxu0 0.0
    %91 = vmatprep.subr.mxu0 0.0
    %92 = vmatpush2.msra.mxu0 0.0
    %93 = vmatprep.subr.mxu0 0.0
    %94 = vmatpush2.msra.mxu0 0.0
    %95 = vmatprep.subr.mxu0 0.0
    %96 = vmatpush2.msra.mxu0 0.0
    %97 = vmatprep.subr.mxu0 0.0
    %98 = vmatpush2.msra.mxu0 0.0
    %99 = vmatprep.subr.mxu0 0.0
    %100 = vmatpush2.msra.mxu0 0.0
    %101 = vmatprep.subr.mxu0 0.0
    %102 = vmatpush2.msra.mxu0 0.0
    %103 = vmatprep.subr.mxu0 0.0
    %104 = vmatpush2.msra.mxu0 0.0
    %105 = vmatprep.subr.mxu0 0.0
    %106 = vmatpush2.msra.mxu0 0.0
    %107 = vmatprep.subr.mxu0 0.0
    %108 = vmatpush2.msra.mxu0 0.0
    %109 = vmatprep.subr.mxu0 0.0
    %110 = vmatpush2.msra.mxu0 0.0
    %111 = vmatprep.mubr.f32.mxu0 0.0
    %112 = vmatmul.mubr.f32.gmra.mxu0 %v45
    %v113 = vpop.f32.mrf.mxu0
    %v114 = vadd.f32 0.0, %v113
    %v115 = vpop.f32.mrf.mxu0
    %116 = vdwg.mxu0
    %vm117 = vcmask 261120
    %v119 = vsel %vm117, %v35, 0
    %121 = vmatprep.subr.mxu0 0.0
    %122 = vmatpush1.msra.mxu0 0.0
    %123 = vmatprep.subr.mxu0 0.0
    %124 = vmatpush1.msra.mxu0 0.0
    %125 = vmatprep.subr.mxu0 0.0
    %126 = vmatpush1.msra.mxu0 0.0
    %127 = vmatprep.subr.mxu0 0.0
    %128 = vmatpush1.msra.mxu0 0.0
    %129 = vmatprep.subr.mxu0 0.0
    %130 = vmatpush1.msra.mxu0 0.0
    %131 = vmatprep.subr.mxu0 0.0
    %132 = vmatpush1.msra.mxu0 0.0
    %133 = vmatprep.subr.mxu0 0.0
    %134 = vmatpush1.msra.mxu0 0.0
    %135 = vmatprep.subr.mxu0 0.0
    %136 = vmatpush1.msra.mxu0 0.0
    %137 = vmatprep.subr.mxu0 0.0
    %138 = vmatpush1.msra.mxu0 0.0
    %139 = vmatprep.subr.mxu0 0.0
    %140 = vmatpush1.msra.mxu0 0.0
    %141 = vmatprep.subr.mxu0 0.0
    %142 = vmatpush1.msra.mxu0 0.0
    %143 = vmatprep.subr.mxu0 0.0
    %144 = vmatpush1.msra.mxu0 0.0
    %145 = vmatprep.subr.mxu0 0.0
    %146 = vmatpush1.msra.mxu0 %v39
    %147 = vmatprep.subr.mxu0 0.0
    %148 = vmatpush1.msra.mxu0 %v38
    %149 = vmatprep.subr.mxu0 0.0
    %150 = vmatpush1.msra.mxu0 %v37
    %151 = vmatprep.subr.mxu0 0.0
    %152 = vmatpush1.msra.mxu0 %v36
    %153 = vmatprep.subr.mxu0 0.0
    %154 = vmatpush2.msra.mxu0 0.0
    %155 = vmatprep.subr.mxu0 0.0
    %156 = vmatpush2.msra.mxu0 0.0
    %157 = vmatprep.subr.mxu0 0.0
    %158 = vmatpush2.msra.mxu0 0.0
    %159 = vmatprep.subr.mxu0 0.0
    %160 = vmatpush2.msra.mxu0 0.0
    %161 = vmatprep.subr.mxu0 0.0
    %162 = vmatpush2.msra.mxu0 0.0
    %163 = vmatprep.subr.mxu0 0.0
    %164 = vmatpush2.msra.mxu0 0.0
    %165 = vmatprep.subr.mxu0 0.0
    %166 = vmatpush2.msra.mxu0 0.0
    %167 = vmatprep.subr.mxu0 0.0
    %168 = vmatpush2.msra.mxu0 0.0
    %169 = vmatprep.subr.mxu0 0.0
    %170 = vmatpush2.msra.mxu0 0.0
    %171 = vmatprep.subr.mxu0 0.0
    %172 = vmatpush2.msra.mxu0 0.0
    %173 = vmatprep.subr.mxu0 0.0
    %174 = vmatpush2.msra.mxu0 0.0
    %175 = vmatprep.subr.mxu0 0.0
    %176 = vmatpush2.msra.mxu0 0.0
    %177 = vmatprep.subr.mxu0 0.0
    %178 = vmatpush2.msra.mxu0 0.0
    %179 = vmatprep.subr.mxu0 0.0
    %180 = vmatpush2.msra.mxu0 0.0
    %181 = vmatprep.subr.mxu0 0.0
    %182 = vmatpush2.msra.mxu0 0.0
    %183 = vmatprep.subr.mxu0 0.0
    %184 = vmatpush2.msra.mxu0 0.0
    %185 = vmatprep.mubr.f32.mxu0 0.0
    %186 = vmatmul.mubr.f32.gmra.mxu0 %v119
    %v187 = vpop.f32.mrf.mxu0
    %v188 = vadd.f32 %v114, %v187
    %v189 = vpop.f32.mrf.mxu0
    %190 = vdwg.mxu0
    %v191 = vld [vmem:[%s4] sm:$0x1]
    %v193 = vlaneseq
    %v194 = vshrl.u32 %v193, 7
    %v195 = vsub.s32 0, %v194
    %v196 = vrot.slane %v191, %v195
    %v198 = vadd.f32 %v188, %v196
    %v199 = vmax.f32 %v198, 0.0
    %200 = vst [vmem:[#allocation5] sm:$0x3] %v199
    // Predicated region
    $region26: #{_combined_call.1} parent=1 // pred_check
      _
    $region27: #{_combined_call.1} parent=1 // pred_check_branch
      %202 = sbr.rel (0) target = $region29
    $region28: #{_combined_call.1} parent=1 // pred_region
      %s204 = ssub.s32 32, 32
      %205 = vsyncadd [#allocation4], %s204
      %s207 = sshll.u32 [#allocation5], 4
      %s208 = int_to_ptr.vmem [resolvable:$true] %s207
      %210 = dma.vmem_to_hbm [thread:$0]  %s208, 32, %s5, [#allocation4]
    $region29: #{_combined_call.1} parent=1 // pred_fallthru
      _
    // Predicated region
    $region30: #{_combined_call.1} parent=1 // pred_check
      _
    $region31: #{_combined_call.1} parent=1 // pred_check_branch
      %212 = sbr.rel (0) target = $region33
    $region32: #{_combined_call.1} parent=1 // pred_region
      %213 = dma.done [#allocation4], 32
    $region33: #{_combined_call.1} parent=1 // pred_fallthru
      _
    %214 = vsyncpa [#allocation3], 1
    %215 = vsyncpa [#allocation4], 1

</llo_original>
